<compile_context>
chip_gen: v5e
topology: v5e:2x2
jax: 0.10.0
libtpu: 0.0.40
codegen_flags: <defaults>
</compile_context>

<pallas_src>
import functools

import jax
import jax.numpy as jnp
from jax.experimental import pallas as pl
from jax.experimental.pallas import tpu as pltpu

_LANE = 128   # pad every feature dim to a multiple of this (lane width)
_SUBLANE = 8  # row-dim alignment
_TM = 128     # max batch-tile rows per grid step


def _round_up(n: int, m: int) -> int:
    return ((n + m - 1) // m) * m


def _mlp_kernel(x_ref, w1_ref, b1_ref, w2_ref, b2_ref, w3_ref, b3_ref, o_ref):
    # fc1 + ReLU
    h1 = jnp.dot(x_ref[...], w1_ref[...], preferred_element_type=jnp.float32)
    h1 = jnp.maximum(h1 + b1_ref[...], 0.0)
    # fc2 + ReLU
    h2 = jnp.dot(h1, w2_ref[...], preferred_element_type=jnp.float32)
    h2 = jnp.maximum(h2 + b2_ref[...], 0.0)
    # fc3 (no activation)
    out = jnp.dot(h2, w3_ref[...], preferred_element_type=jnp.float32)
    o_ref[...] = (out + b3_ref[...]).astype(o_ref.dtype)


@jax.jit
def neural_net_forward(x, params):
    """x: [B, input_size] float32. params: transposed [in,out] weights, [1,out] biases."""
    w1, b1 = params["w1"], params["b1"]
    w2, b2 = params["w2"], params["b2"]
    w3, b3 = params["w3"], params["b3"]

    batch, d_in = x.shape
    d_h = w1.shape[1]
    d_out = w3.shape[1]

    # Batch tile: whole (sublane-aligned) batch if small, else 128-row tiles.
    block_m = min(_TM, _round_up(batch, _SUBLANE))

    # Lane-dense / sublane-aligned padded sizes.
    bp = _round_up(batch, block_m)
    dip = _round_up(d_in, _LANE)
    dhp = _round_up(d_h, _LANE)
    dop = _round_up(d_out, _LANE)

    def pad2(a, rows, cols):
        return jnp.pad(a, ((0, rows - a.shape[0]), (0, cols - a.shape[1])))

    xp = pad2(x, bp, dip)
    w1p, b1p = pad2(w1, dip, dhp), pad2(b1, 1, dhp)
    w2p, b2p = pad2(w2, dhp, dhp), pad2(b2, 1, dhp)
    w3p, b3p = pad2(w3, dhp, dop), pad2(b3, 1, dop)

    grid = (bp // block_m,)

    # Weights/biases: one resident VMEM copy across the whole grid.
    def resident(a):
        return pl.BlockSpec(a.shape, lambda i: (0,) * a.ndim)

    flops = 2 * bp * (dip * dhp + dhp * dhp + dhp * dop)
    bytes_accessed = 4 * (xp.size + w1p.size + b1p.size + w2p.size + b2p.size
                          + w3p.size + b3p.size + bp * dop)

    out_padded = pl.pallas_call(
        _mlp_kernel,
        out_shape=jax.ShapeDtypeStruct((bp, dop), jnp.float32),
        grid=grid,
        in_specs=[
            pl.BlockSpec((block_m, dip), lambda i: (i, 0)),   # x: batch-tiled
            resident(w1p), resident(b1p),
            resident(w2p), resident(b2p),
            resident(w3p), resident(b3p),
        ],
        out_specs=pl.BlockSpec((block_m, dop), lambda i: (i, 0)),
        compiler_params=pltpu.CompilerParams(
            dimension_semantics=("parallel",)),
        cost_estimate=pl.CostEstimate(
            flops=flops, transcendentals=0, bytes_accessed=bytes_accessed),
    )(xp, w1p, b1p, w2p, b2p, w3p, b3p)

    return out_padded[:batch, :d_out]


def init_params(key, input_size, hidden_size, num_classes):
    """Deterministic init mirroring torch nn.Linear (uniform +/- 1/sqrt(fan_in)),
    weights stored as [in, out] (transposed) for the kernel."""
    ks = jax.random.split(key, 6)

    def linear(kw, kb, fan_in, fan_out):
        bound = 1.0 / jnp.sqrt(fan_in)
        w = jax.random.uniform(kw, (fan_in, fan_out), jnp.float32, -bound, bound)
        b = jax.random.uniform(kb, (1, fan_out), jnp.float32, -bound, bound)
        return w, b

    w1, b1 = linear(ks[0], ks[1], input_size, hidden_size)
    w2, b2 = linear(ks[2], ks[3], hidden_size, hidden_size)
    w3, b3 = linear(ks[4], ks[5], hidden_size, num_classes)
    return {"w1": w1, "b1": b1, "w2": w2, "b2": b2, "w3": w3, "b3": b3}


if __name__ == "__main__":
    input_size, hidden_size, num_classes = 32, 64, 16
    batch = 8

    key = jax.random.PRNGKey(0)
    k_x, k_p = jax.random.split(key)
    x = jax.random.normal(k_x, (batch, input_size), jnp.float32)
    params = init_params(k_p, input_size, hidden_size, num_classes)

    out = neural_net_forward(x, params)
    jax.block_until_ready(out)

    # Pure-JAX reference check (same math, outside Pallas).
    h1 = jnp.maximum(x @ params["w1"] + params["b1"], 0.0)
    h2 = jnp.maximum(h1 @ params["w2"] + params["b2"], 0.0)
    ref = h2 @ params["w3"] + params["b3"]
    assert out.shape == (batch, num_classes)
    assert jnp.allclose(out, ref, atol=1e-5, rtol=1e-5)

    print("KERNEL_OK")
</pallas_src>

<mosaic_0001>
module attributes {stable_mosaic.version = 11 : i64} {
  func.func @_mlp_kernel(%arg0: i32, %arg1: memref<8x128xf32, #tpu.memory_space<vmem>>, %arg2: memref<128x128xf32, #tpu.memory_space<vmem>>, %arg3: memref<1x128xf32, #tpu.memory_space<vmem>>, %arg4: memref<128x128xf32, #tpu.memory_space<vmem>>, %arg5: memref<1x128xf32, #tpu.memory_space<vmem>>, %arg6: memref<128x128xf32, #tpu.memory_space<vmem>>, %arg7: memref<1x128xf32, #tpu.memory_space<vmem>>, %arg8: memref<8x128xf32, #tpu.memory_space<vmem>>) attributes {dimension_semantics = [#tpu.dimension_semantics<parallel>], iteration_bounds = array<i64: 1>, scalar_prefetch = 0 : i64, scratch_operands = 0 : i64, tpu.core_type = #tpu.core_type<tc>, window_params = [{transform_indices = @transform_0, window_bounds = array<i64: 8, 128>}, {pipeline_mode = #tpu.pipeline_mode<synchronous>, transform_indices = @transform_1, window_bounds = array<i64: 128, 128>}, {pipeline_mode = #tpu.pipeline_mode<synchronous>, transform_indices = @transform_2, window_bounds = array<i64: 1, 128>}, {pipeline_mode = #tpu.pipeline_mode<synchronous>, transform_indices = @transform_3, window_bounds = array<i64: 128, 128>}, {pipeline_mode = #tpu.pipeline_mode<synchronous>, transform_indices = @transform_4, window_bounds = array<i64: 1, 128>}, {pipeline_mode = #tpu.pipeline_mode<synchronous>, transform_indices = @transform_5, window_bounds = array<i64: 128, 128>}, {pipeline_mode = #tpu.pipeline_mode<synchronous>, transform_indices = @transform_6, window_bounds = array<i64: 1, 128>}, {transform_indices = @transform_7, window_bounds = array<i64: 8, 128>}]} {
    %c0 = arith.constant 0 : index
    %c0_0 = arith.constant 0 : index
    %0 = vector.load %arg1[%c0, %c0_0] : memref<8x128xf32, #tpu.memory_space<vmem>>, vector<8x128xf32>
    %c0_1 = arith.constant 0 : index
    %c0_2 = arith.constant 0 : index
    %1 = vector.load %arg2[%c0_1, %c0_2] : memref<128x128xf32, #tpu.memory_space<vmem>>, vector<128x128xf32>
    %cst = arith.constant dense<0.000000e+00> : vector<8x128xf32>
    %2 = tpu.matmul %0, %1, %cst {dimension_numbers = #tpu.dot_dimension_numbers<[1], [0], [0], [1], [0, 0, 1, 1], [], []>} : vector<8x128xf32>, vector<128x128xf32>, vector<8x128xf32> -> vector<8x128xf32>
    %c0_3 = arith.constant 0 : index
    %c0_4 = arith.constant 0 : index
    %3 = vector.load %arg3[%c0_3, %c0_4] : memref<1x128xf32, #tpu.memory_space<vmem>>, vector<1x128xf32>
    %4 = vector.broadcast %3 : vector<1x128xf32> to vector<8x128xf32>
    %5 = arith.addf %2, %4 : vector<8x128xf32>
    %cst_5 = arith.constant 0.000000e+00 : f32
    %6 = vector.broadcast %cst_5 : f32 to vector<8x128xf32>
    %7 = arith.maximumf %5, %6 : vector<8x128xf32>
    %c0_6 = arith.constant 0 : index
    %c0_7 = arith.constant 0 : index
    %8 = vector.load %arg4[%c0_6, %c0_7] : memref<128x128xf32, #tpu.memory_space<vmem>>, vector<128x128xf32>
    %cst_8 = arith.constant dense<0.000000e+00> : vector<8x128xf32>
    %9 = tpu.matmul %7, %8, %cst_8 {dimension_numbers = #tpu.dot_dimension_numbers<[1], [0], [0], [1], [0, 0, 1, 1], [], []>} : vector<8x128xf32>, vector<128x128xf32>, vector<8x128xf32> -> vector<8x128xf32>
    %c0_9 = arith.constant 0 : index
    %c0_10 = arith.constant 0 : index
    %10 = vector.load %arg5[%c0_9, %c0_10] : memref<1x128xf32, #tpu.memory_space<vmem>>, vector<1x128xf32>
    %11 = vector.broadcast %10 : vector<1x128xf32> to vector<8x128xf32>
    %12 = arith.addf %9, %11 : vector<8x128xf32>
    %cst_11 = arith.constant 0.000000e+00 : f32
    %13 = vector.broadcast %cst_11 : f32 to vector<8x128xf32>
    %14 = arith.maximumf %12, %13 : vector<8x128xf32>
    %c0_12 = arith.constant 0 : index
    %c0_13 = arith.constant 0 : index
    %15 = vector.load %arg6[%c0_12, %c0_13] : memref<128x128xf32, #tpu.memory_space<vmem>>, vector<128x128xf32>
    %cst_14 = arith.constant dense<0.000000e+00> : vector<8x128xf32>
    %16 = tpu.matmul %14, %15, %cst_14 {dimension_numbers = #tpu.dot_dimension_numbers<[1], [0], [0], [1], [0, 0, 1, 1], [], []>} : vector<8x128xf32>, vector<128x128xf32>, vector<8x128xf32> -> vector<8x128xf32>
    %c0_15 = arith.constant 0 : index
    %c0_16 = arith.constant 0 : index
    %17 = vector.load %arg7[%c0_15, %c0_16] : memref<1x128xf32, #tpu.memory_space<vmem>>, vector<1x128xf32>
    %18 = vector.broadcast %17 : vector<1x128xf32> to vector<8x128xf32>
    %19 = arith.addf %16, %18 : vector<8x128xf32>
    %c0_17 = arith.constant 0 : index
    %c0_18 = arith.constant 0 : index
    %20 = vector.load %arg8[%c0_17, %c0_18] : memref<8x128xf32, #tpu.memory_space<vmem>>, vector<8x128xf32>
    tpu.vector_store %arg8[%c0_17, %c0_18], %19 {strides = array<i32>} : memref<8x128xf32, #tpu.memory_space<vmem>>, vector<8x128xf32>,
    return
  }
  func.func @transform_0(%arg0: i32) -> (i32, i32) {
    %c0_i32 = arith.constant 0 : i32
    %c0_i32_0 = arith.constant 0 : i32
    return %arg0, %c0_i32 : i32, i32
  }
  func.func @transform_1(%arg0: i32) -> (i32, i32) {
    %c0_i32 = arith.constant 0 : i32
    %c0_i32_0 = arith.constant 0 : i32
    %c0_i32_1 = arith.constant 0 : i32
    return %c0_i32, %c0_i32_0 : i32, i32
  }
  func.func @transform_2(%arg0: i32) -> (i32, i32) {
    %c0_i32 = arith.constant 0 : i32
    %c0_i32_0 = arith.constant 0 : i32
    %c0_i32_1 = arith.constant 0 : i32
    return %c0_i32, %c0_i32_0 : i32, i32
  }
  func.func @transform_3(%arg0: i32) -> (i32, i32) {
    %c0_i32 = arith.constant 0 : i32
    %c0_i32_0 = arith.constant 0 : i32
    %c0_i32_1 = arith.constant 0 : i32
    return %c0_i32, %c0_i32_0 : i32, i32
  }
  func.func @transform_4(%arg0: i32) -> (i32, i32) {
    %c0_i32 = arith.constant 0 : i32
    %c0_i32_0 = arith.constant 0 : i32
    %c0_i32_1 = arith.constant 0 : i32
    return %c0_i32, %c0_i32_0 : i32, i32
  }
  func.func @transform_5(%arg0: i32) -> (i32, i32) {
    %c0_i32 = arith.constant 0 : i32
    %c0_i32_0 = arith.constant 0 : i32
    %c0_i32_1 = arith.constant 0 : i32
    return %c0_i32, %c0_i32_0 : i32, i32
  }
  func.func @transform_6(%arg0: i32) -> (i32, i32) {
    %c0_i32 = arith.constant 0 : i32
    %c0_i32_0 = arith.constant 0 : i32
    %c0_i32_1 = arith.constant 0 : i32
    return %c0_i32, %c0_i32_0 : i32, i32
  }
  func.func @transform_7(%arg0: i32) -> (i32, i32) {
    %c0_i32 = arith.constant 0 : i32
    %c0_i32_0 = arith.constant 0 : i32
    return %arg0, %c0_i32 : i32, i32
  }
}

</mosaic_0001>

<llo_original>
// kernel: neural_net_forward.1
$region0: #{neural_net_forward.1}
  #allocation0 [shape = 'u32[]', space=smem, size = 0x4, offset = 0x4, fixed_abs, tag = 'smem constant byte address 0x4 - core index']
  #allocation1 [shape = 'u32[72,128]{1,0:T(1,128)}', space=vmem, size = 0x9000, scoped, tag = 'internal scratch']
  %s0 = inlined_call_operand.vmem [shape: f32[8,128], index: 0, kind: input, shape index: {}]
  %s1 = inlined_call_operand.vmem [shape: f32[128,128], index: 1, kind: input, shape index: {}]
  %s2 = inlined_call_operand.vmem [shape: f32[1,128], index: 2, kind: input, shape index: {}]
  %s3 = inlined_call_operand.vmem [shape: f32[128,128], index: 3, kind: input, shape index: {}]
  %s4 = inlined_call_operand.vmem [shape: f32[1,128], index: 4, kind: input, shape index: {}]
  %s5 = inlined_call_operand.vmem [shape: f32[128,128], index: 5, kind: input, shape index: {}]
  %s6 = inlined_call_operand.vmem [shape: f32[1,128], index: 6, kind: input, shape index: {}]
  %s7 = inlined_call_operand.hbm [shape: f32[8,128], index: 7, kind: output, shape index: {}]
  %s8 = sld [smem:[#allocation0]]
  $region38: #{neural_net_forward.1} parent=0
    _
  %s10 = ssub.s32 1, %s8
  %s11 = scalar_select 0, %s10, %s8
  $region1: #{neural_net_forward.1} parent=0
    #allocation2 [shape = 'u8[4096]{0}', space=vmem, size = 0x1000, scoped, tag = 'output window, operand 0, single buffered']
    #allocation3 [shape = 's32[1]{0}', space=sflag, size = 0x4, scoped, tag = 'scoped memory for neural_net_forward.1']
    %12 = vsyncpa [#allocation3], 0
    // Predicated region
    $region2: #{neural_net_forward.1} parent=1 // pred_check
      _
    $region3: #{neural_net_forward.1} parent=1 // pred_check_branch
      %14 = sbr.rel (0) target = $region5
    $region4: #{neural_net_forward.1} parent=1 // pred_region
      _
    $region5: #{neural_net_forward.1} parent=1 // pred_fallthru
      _
    // Predicated region
    $region6: #{neural_net_forward.1} parent=1 // pred_check
      _
    $region7: #{neural_net_forward.1} parent=1 // pred_check_branch
      %16 = sbr.rel (0) target = $region9
    $region8: #{neural_net_forward.1} parent=1 // pred_region
      _
    $region9: #{neural_net_forward.1} parent=1 // pred_fallthru
      _
    // Predicated region
    $region10: #{neural_net_forward.1} parent=1 // pred_check
      _
    $region11: #{neural_net_forward.1} parent=1 // pred_check_branch
      %18 = sbr.rel (0) target = $region13
    $region12: #{neural_net_forward.1} parent=1 // pred_region
      _
    $region13: #{neural_net_forward.1} parent=1 // pred_fallthru
      _
    // Predicated region
    $region14: #{neural_net_forward.1} parent=1 // pred_check
      _
    $region15: #{neural_net_forward.1} parent=1 // pred_check_branch
      %20 = sbr.rel (0) target = $region17
    $region16: #{neural_net_forward.1} parent=1 // pred_region
      _
    $region17: #{neural_net_forward.1} parent=1 // pred_fallthru
      _
    // Predicated region
    $region18: #{neural_net_forward.1} parent=1 // pred_check
      _
    $region19: #{neural_net_forward.1} parent=1 // pred_check_branch
      %22 = sbr.rel (0) target = $region21
    $region20: #{neural_net_forward.1} parent=1 // pred_region
      _
    $region21: #{neural_net_forward.1} parent=1 // pred_fallthru
      _
    // Predicated region
    $region22: #{neural_net_forward.1} parent=1 // pred_check
      _
    $region23: #{neural_net_forward.1} parent=1 // pred_check_branch
      %24 = sbr.rel (0) target = $region25
    $region24: #{neural_net_forward.1} parent=1 // pred_region
      _
    $region25: #{neural_net_forward.1} parent=1 // pred_fallthru
      _
    // Predicated region
    $region26: #{neural_net_forward.1} parent=1 // pred_check
      _
    $region27: #{neural_net_forward.1} parent=1 // pred_check_branch
      %26 = sbr.rel (0) target = $region29
    $region28: #{neural_net_forward.1} parent=1 // pred_region
      _
    $region29: #{neural_net_forward.1} parent=1 // pred_fallthru
      _
    %v27 = vld [vmem:[%s0] sm:$0xff]
    %v28 = vld [vmem:[%s1] sm:$0xff]
    %v29 = vld [vmem:[%s1 + $0x8] sm:$0xff]
    %v30 = vld [vmem:[%s1 + $0x10] sm:$0xff]
    %v31 = vld [vmem:[%s1 + $0x18] sm:$0xff]
    %v32 = vld [vmem:[%s1 + $0x20] sm:$0xff]
    %v33 = vld [vmem:[%s1 + $0x28] sm:$0xff]
    %v34 = vld [vmem:[%s1 + $0x30] sm:$0xff]
    %v35 = vld [vmem:[%s1 + $0x38] sm:$0xff]
    %v36 = vld [vmem:[%s1 + $0x40] sm:$0xff]
    %v37 = vld [vmem:[%s1 + $0x48] sm:$0xff]
    %v38 = vld [vmem:[%s1 + $0x50] sm:$0xff]
    %v39 = vld [vmem:[%s1 + $0x58] sm:$0xff]
    %v40 = vld [vmem:[%s1 + $0x60] sm:$0xff]
    %v41 = vld [vmem:[%s1 + $0x68] sm:$0xff]
    %v42 = vld [vmem:[%s1 + $0x70] sm:$0xff]
    %v43 = vld [vmem:[%s1 + $0x78] sm:$0xff]
    %v44 = vld [vmem:[%s2] sm:$0x1]
    %v46 = vperm.slane %v44, 0
    %48 = vmatpush.msra.mxu0 %v43
    %49 = vmatpush.msra.mxu0 %v42
    %50 = vmatpush.msra.mxu0 %v41
    %51 = vmatpush.msra.mxu0 %v40
    %52 = vmatpush.msra.mxu0 %v39
    %53 = vmatpush.msra.mxu0 %v38
    %54 = vmatpush.msra.mxu0 %v37
    %55 = vmatpush.msra.mxu0 %v36
    %56 = vmatpush.msra.mxu0 %v35
    %57 = vmatpush.msra.mxu0 %v34
    %58 = vmatpush.msra.mxu0 %v33
    %59 = vmatpush.msra.mxu0 %v32
    %60 = vmatpush.msra.mxu0 %v31
    %61 = vmatpush.msra.mxu0 %v30
    %62 = vmatpush.msra.mxu0 %v29
    %63 = vmatpush.msra.mxu0 %v28
    %64 = vmatmul.f32.gmra.mxu0 %v27
    %v65 = vpop.f32.mrf.mxu0
    %v66 = vadd.f32 %v46, %v65
    %67 = vdwg.mxu0
    %v68 = vmax.f32 %v66, 0.0
    %v69 = vld [vmem:[%s3] sm:$0xff]
    %v70 = vld [vmem:[%s3 + $0x8] sm:$0xff]
    %v71 = vld [vmem:[%s3 + $0x10] sm:$0xff]
    %v72 = vld [vmem:[%s3 + $0x18] sm:$0xff]
    %v73 = vld [vmem:[%s3 + $0x20] sm:$0xff]
    %v74 = vld [vmem:[%s3 + $0x28] sm:$0xff]
    %v75 = vld [vmem:[%s3 + $0x30] sm:$0xff]
    %v76 = vld [vmem:[%s3 + $0x38] sm:$0xff]
    %v77 = vld [vmem:[%s3 + $0x40] sm:$0xff]
    %v78 = vld [vmem:[%s3 + $0x48] sm:$0xff]
    %v79 = vld [vmem:[%s3 + $0x50] sm:$0xff]
    %v80 = vld [vmem:[%s3 + $0x58] sm:$0xff]
    %v81 = vld [vmem:[%s3 + $0x60] sm:$0xff]
    %v82 = vld [vmem:[%s3 + $0x68] sm:$0xff]
    %v83 = vld [vmem:[%s3 + $0x70] sm:$0xff]
    %v84 = vld [vmem:[%s3 + $0x78] sm:$0xff]
    %v85 = vld [vmem:[%s4] sm:$0x1]
    %v87 = vperm.slane %v85, 0
    %89 = vmatpush.msra.mxu0 %v84
    %90 = vmatpush.msra.mxu0 %v83
    %91 = vmatpush.msra.mxu0 %v82
    %92 = vmatpush.msra.mxu0 %v81
    %93 = vmatpush.msra.mxu0 %v80
    %94 = vmatpush.msra.mxu0 %v79
    %95 = vmatpush.msra.mxu0 %v78
    %96 = vmatpush.msra.mxu0 %v77
    %97 = vmatpush.msra.mxu0 %v76
    %98 = vmatpush.msra.mxu0 %v75
    %99 = vmatpush.msra.mxu0 %v74
    %100 = vmatpush.msra.mxu0 %v73
    %101 = vmatpush.msra.mxu0 %v72
    %102 = vmatpush.msra.mxu0 %v71
    %103 = vmatpush.msra.mxu0 %v70
    %104 = vmatpush.msra.mxu0 %v69
    %105 = vmatmul.f32.gmra.mxu0 %v68
    %v106 = vpop.f32.mrf.mxu0
    %v107 = vadd.f32 %v87, %v106
    %108 = vdwg.mxu0
    %v109 = vmax.f32 %v107, 0.0
    %v110 = vld [vmem:[%s5] sm:$0xff]
    %v111 = vld [vmem:[%s5 + $0x8] sm:$0xff]
    %v112 = vld [vmem:[%s5 + $0x10] sm:$0xff]
    %v113 = vld [vmem:[%s5 + $0x18] sm:$0xff]
    %v114 = vld [vmem:[%s5 + $0x20] sm:$0xff]
    %v115 = vld [vmem:[%s5 + $0x28] sm:$0xff]
    %v116 = vld [vmem:[%s5 + $0x30] sm:$0xff]
    %v117 = vld [vmem:[%s5 + $0x38] sm:$0xff]
    %v118 = vld [vmem:[%s5 + $0x40] sm:$0xff]
    %v119 = vld [vmem:[%s5 + $0x48] sm:$0xff]
    %v120 = vld [vmem:[%s5 + $0x50] sm:$0xff]
    %v121 = vld [vmem:[%s5 + $0x58] sm:$0xff]
    %v122 = vld [vmem:[%s5 + $0x60] sm:$0xff]
    %v123 = vld [vmem:[%s5 + $0x68] sm:$0xff]
    %v124 = vld [vmem:[%s5 + $0x70] sm:$0xff]
    %v125 = vld [vmem:[%s5 + $0x78] sm:$0xff]
    %v126 = vld [vmem:[%s6] sm:$0x1]
    %v128 = vperm.slane %v126, 0
    %130 = vmatpush.msra.mxu0 %v125
    %131 = vmatpush.msra.mxu0 %v124
    %132 = vmatpush.msra.mxu0 %v123
    %133 = vmatpush.msra.mxu0 %v122
    %134 = vmatpush.msra.mxu0 %v121
    %135 = vmatpush.msra.mxu0 %v120
    %136 = vmatpush.msra.mxu0 %v119
    %137 = vmatpush.msra.mxu0 %v118
    %138 = vmatpush.msra.mxu0 %v117
    %139 = vmatpush.msra.mxu0 %v116
    %140 = vmatpush.msra.mxu0 %v115
    %141 = vmatpush.msra.mxu0 %v114
    %142 = vmatpush.msra.mxu0 %v113
    %143 = vmatpush.msra.mxu0 %v112
    %144 = vmatpush.msra.mxu0 %v111
    %145 = vmatpush.msra.mxu0 %v110
    %146 = vmatmul.f32.gmra.mxu0 %v109
    %v147 = vpop.f32.mrf.mxu0
    %v148 = vadd.f32 %v128, %v147
    %149 = vdwg.mxu0
    %150 = vst [vmem:[#allocation2] sm:$0xff] %v148
    // Predicated region
    $region30: #{neural_net_forward.1} parent=1 // pred_check
      _
    $region31: #{neural_net_forward.1} parent=1 // pred_check_branch
      %152 = sbr.rel (0) target = $region33
    $region32: #{neural_net_forward.1} parent=1 // pred_region
      %154 = vsyncadd [#allocation3], 0
      %s156 = sshll.u32 [#allocation2], 4
      %s157 = int_to_ptr.vmem [resolvable:$true] %s156
      %s158 = sshll.u32 %s7, 4
      %s159 = int_to_ptr.hbm [resolvable:$true] %s158
      %161 = dma.vmem_to_hbm [thread:$0]  %s157, 128, %s159, [#allocation3]
    $region33: #{neural_net_forward.1} parent=1 // pred_fallthru
      _
    // Predicated region
    $region34: #{neural_net_forward.1} parent=1 // pred_check
      _
    $region35: #{neural_net_forward.1} parent=1 // pred_check_branch
      %163 = sbr.rel (0) target = $region37
    $region36: #{neural_net_forward.1} parent=1 // pred_region
      %165 = dma.done [#allocation3], 128
    $region37: #{neural_net_forward.1} parent=1 // pred_fallthru
      _
    %166 = vsyncpa [#allocation3], 1

</llo_original>
